<compile_context>
chip_gen: v6e
topology: v6e:2x2x1
jax: 0.10.0
libtpu: 0.0.40
codegen_flags: <defaults>
</compile_context>

<pallas_src>
import functools

import jax
import jax.numpy as jnp
from jax import lax
from jax.experimental import pallas as pl
from jax.experimental.pallas import tpu as pltpu


def _round_up(a, b):
    return (a + b - 1) // b * b


def _cdiv(a, b):
    return (a + b - 1) // b


def _vmem_capacity_bytes():
    try:
        return int(pltpu.get_tpu_info().vmem_capacity_bytes)
    except Exception:
        return 64 * 1024 * 1024  # conservative (v7x per-TC physical VMEM)


def _dual_norm_kernel(x_ref, sum_ref, sq_ref, *, lane_chunks, cols, tile_cols,
                      unroll):
    """x_ref: (R, T) block of the (rows, cols) slab (last blocks may be partial).

    sum_ref / sq_ref: (R, 128) lane-dense f32 accumulators.  Their output block
    index is constant along the column (reduction) grid axis, so they stay
    resident in VMEM across it and are written back to HBM once per row block.
    """
    j = pl.program_id(1)

    @pl.when(j == 0)
    def _init():
        sum_ref[...] = jnp.zeros(sum_ref.shape, sum_ref.dtype)
        sq_ref[...] = jnp.zeros(sq_ref.shape, sq_ref.dtype)

    def accum(n_chunks, acc_s, acc_q):
        # Pure VPU accumulation over 128-lane chunks; short unrolled fori_loop
        # keeps live ranges bounded (no 32-deep static unroll / vreg spills).
        if n_chunks <= 0:
            return acc_s, acc_q

        def body(c, carry):
            s, q = carry
            off = pl.multiple_of(c * 128, 128)
            blk = x_ref[:, pl.ds(off, 128)].astype(jnp.float32)
            return s + blk, q + blk * blk

        return lax.fori_loop(0, n_chunks, body, (acc_s, acc_q),
                             unroll=min(unroll, n_chunks))

    rem = cols % tile_cols  # static Python int

    if rem == 0:
        # Every column block is fully in-bounds: no masking anywhere.
        acc_s, acc_q = accum(lane_chunks, sum_ref[...], sq_ref[...])
        sum_ref[...] = acc_s
        sq_ref[...] = acc_q
    else:
        last_j = pl.num_programs(1) - 1
        full_tail = rem // 128      # fully-valid chunks in the last column block
        part = rem % 128            # valid lanes in the final partial chunk

        @pl.when(j != last_j)
        def _full_block():
            acc_s, acc_q = accum(lane_chunks, sum_ref[...], sq_ref[...])
            sum_ref[...] = acc_s
            sq_ref[...] = acc_q

        @pl.when(j == last_j)
        def _tail_block():
            acc_s, acc_q = accum(full_tail, sum_ref[...], sq_ref[...])
            if part:
                # Single masked chunk: out-of-bounds lanes hold garbage (the
                # partial DMA does not zero them), so zero them explicitly.
                off = full_tail * 128
                blk = x_ref[:, off:off + 128].astype(jnp.float32)
                lane = lax.broadcasted_iota(jnp.int32, blk.shape, 1)
                blk = jnp.where(lane < part, blk, 0.0)
                acc_s = acc_s + blk
                acc_q = acc_q + blk * blk
            sum_ref[...] = acc_s
            sq_ref[...] = acc_q


def _per_row_moments(x):
    """Returns lane-dense per-(n, c) partial sums / sums-of-squares.

    Output shapes: (N*C, 128) each; reduce over axis=-1 in the caller.
    """
    N, C, H, W = x.shape
    rows = N * C
    cols = H * W

    # Free reshape of contiguous NCHW -> (N*C, H*W); no transpose / no copy
    # (with the default row-major layout this stays a bitcast in HLO).
    x2d = x.reshape(rows, cols)

    rows_p8 = _round_up(rows, 8)

    # Row block: cap at 64 (two (R,128) f32 accumulators + streamed chunk stay
    # well inside the 64-vreg file); give the "parallel" row axis >= 2 blocks
    # when the row count allows it (v7x has 2 TensorCores).
    R = min(64, rows_p8)
    if _cdiv(rows_p8, R) < 2 and R > 8:
        R = max(8, _round_up(_cdiv(rows, 2), 8))

    # Column tile: multiple of 128 sized so the streamed input block is ~4 MiB
    # (double-buffered ~8 MiB).  No divisibility constraint: cdiv grid plus the
    # in-kernel tail mask handle ragged extents.
    itemsize = jnp.dtype(x.dtype).itemsize
    vmem_cap = _vmem_capacity_bytes()
    target_block_bytes = min(vmem_cap // 16, 4 * 1024 * 1024)
    cols_ceil = _round_up(cols, 128)
    T = max(128, (target_block_bytes // (R * itemsize)) // 128 * 128)
    T = min(T, cols_ceil)
    lane_chunks = T // 128

    grid = (_cdiv(rows, R), _cdiv(cols, T))

    # Explicit VMEM budget: 2x double-buffered input block + tiny lane-dense
    # output blocks + margin; stays under v5e's default when blocks are small
    # and unlocks larger blocks on v6e/v7x.
    block_bytes = R * T * itemsize
    out_bytes = 2 * 2 * R * 128 * 4
    vmem_limit = int(min(vmem_cap,
                         max(16 * 1024 * 1024,
                             2 * block_bytes + out_bytes + (8 << 20))))

    kernel = functools.partial(_dual_norm_kernel, lane_chunks=lane_chunks,
                               cols=cols, tile_cols=T, unroll=8)

    out_sum, out_sq = pl.pallas_call(
        kernel,
        out_shape=(
            jax.ShapeDtypeStruct((rows_p8, 128), jnp.float32),
            jax.ShapeDtypeStruct((rows_p8, 128), jnp.float32),
        ),
        grid_spec=pltpu.PrefetchScalarGridSpec(
            num_scalar_prefetch=0,
            grid=grid,
            in_specs=[
                pl.BlockSpec((R, T), lambda i, j: (i, j)),
            ],
            out_specs=[
                pl.BlockSpec((R, 128), lambda i, j: (i, 0)),
                pl.BlockSpec((R, 128), lambda i, j: (i, 0)),
            ],
        ),
        compiler_params=pltpu.CompilerParams(
            dimension_semantics=("parallel", "arbitrary"),
            vmem_limit_bytes=vmem_limit),
    )(x2d)

    # Ragged tail rows (if any) contain garbage partials: slice them away here.
    return out_sum[:rows], out_sq[:rows]


def dual_norm_forward(x, mu, lam, mean_buf, var_buf, tracking_times, *, training=True):
    N, C, H, W = x.shape
    M = N * H * W

    sum_part, sq_part = _per_row_moments(x)           # (N*C, 128) each

    # Tiny O(N*C*128) epilogue in XLA: lane reduce + combine over N + normalize.
    # NOTE: f32 accumulation; for extremely large H*W expect small drift vs a
    # f64 reference (matches the PyTorch f32 behavior class).
    ch_sum = sum_part.reshape(N, C, 128).sum(axis=(0, 2))
    ch_sq = sq_part.reshape(N, C, 128).sum(axis=(0, 2))
    mean = ch_sum / jnp.float32(M)                    # == x.mean([0, 2, 3])
    var = ch_sq / jnp.float32(M) - 1.0                # == (x**2 - 1).mean([0, 2, 3])

    new_mean_buf = mean_buf + mean
    new_var_buf = var_buf + var

    if training:
        new_tt = tracking_times + 1
        weight_mean = jnp.sum(mu * mean)              # O(C) dots: free in XLA
        weight_var = jnp.sum(lam * var)
    else:
        new_tt = tracking_times
        weight_mean = None
        weight_var = None

    # Forward output is x unchanged (identity), plus updated buffers / scalars.
    # TODO(synk): in-place nn.Module buffer mutation has no Pallas equivalent;
    # the updated buffers are returned functionally instead.
    return x, new_mean_buf, new_var_buf, new_tt, weight_mean, weight_var


if __name__ == "__main__":
    N, C, H, W = 2, 4, 16, 16
    key = jax.random.PRNGKey(0)
    key_a, key_b = jax.random.split(key)
    x = jax.random.normal(key_a, (N, C, H, W), dtype=jnp.float32)

    # Module __init__ fills mu_/lambda_ with 0; use small nonzero values so the
    # weight_mean / weight_var paths are exercised non-trivially.
    mu = jnp.linspace(0.1, 0.4, C, dtype=jnp.float32)
    lam = jnp.linspace(-0.2, 0.2, C, dtype=jnp.float32)
    mean_buf = jnp.zeros((C,), dtype=jnp.float32)
    var_buf = jnp.zeros((C,), dtype=jnp.float32)
    tracking_times = jnp.array(0, dtype=jnp.int32)

    out_x, new_mean_buf, new_var_buf, new_tt, wmean, wvar = dual_norm_forward(
        x, mu, lam, mean_buf, var_buf, tracking_times, training=True)
    jax.block_until_ready((out_x, new_mean_buf, new_var_buf, new_tt, wmean, wvar))

    # Pure-JAX reference check.
    ref_mean = jnp.mean(x, axis=(0, 2, 3))
    ref_var = jnp.mean(x * x - 1.0, axis=(0, 2, 3))
    assert jnp.allclose(out_x, x)
    assert jnp.allclose(new_mean_buf, mean_buf + ref_mean, atol=1e-5)
    assert jnp.allclose(new_var_buf, var_buf + ref_var, atol=1e-5)
    assert jnp.allclose(wmean, jnp.sum(mu * ref_mean), atol=1e-5)
    assert jnp.allclose(wvar, jnp.sum(lam * ref_var), atol=1e-5)
    assert int(new_tt) == 1

    # Ragged-edge path (cols % 128 != 0, rows % 8 != 0): exercises the in-kernel
    # tail mask and partial blocks instead of padding.
    x2 = jax.random.normal(key_b, (2, 3, 5, 9), dtype=jnp.float32)
    s2, q2 = _per_row_moments(x2)
    x2d = x2.reshape(6, 45)
    assert jnp.allclose(s2.sum(axis=1), x2d.sum(axis=1), atol=1e-4)
    assert jnp.allclose(q2.sum(axis=1), (x2d * x2d).sum(axis=1), atol=1e-4)

    print("KERNEL_OK")
</pallas_src>

<mosaic_0001>
module attributes {stable_mosaic.version = 11 : i64} {
  func.func @_dual_norm_kernel(%arg0: i32, %arg1: i32, %arg2: memref<8x256xf32, #tpu.memory_space<vmem>>, %arg3: memref<8x128xf32, #tpu.memory_space<vmem>>, %arg4: memref<8x128xf32, #tpu.memory_space<vmem>>) attributes {dimension_semantics = [#tpu.dimension_semantics<parallel>, #tpu.dimension_semantics<arbitrary>], iteration_bounds = array<i64: 1, 1>, scalar_prefetch = 0 : i64, scratch_operands = 0 : i64, tpu.core_type = #tpu.core_type<tc>, window_params = [{transform_indices = @transform_0, window_bounds = array<i64: 8, 256>}, {transform_indices = @transform_1, window_bounds = array<i64: 8, 128>}, {transform_indices = @transform_2, window_bounds = array<i64: 8, 128>}]} {
    %c0_i32 = arith.constant 0 : i32
    %0 = arith.cmpi eq, %arg1, %c0_i32 : i32
    %1 = arith.extui %0 : i1 to i32
    %c0_i32_0 = arith.constant 0 : i32
    %2 = arith.cmpi ne, %1, %c0_i32_0 : i32
    scf.if %2 {
      %cst = arith.constant 0.000000e+00 : f32
      %21 = vector.broadcast %cst : f32 to vector<8x128xf32>
      %c0_12 = arith.constant 0 : index
      %c0_13 = arith.constant 0 : index
      %22 = vector.load %arg3[%c0_12, %c0_13] : memref<8x128xf32, #tpu.memory_space<vmem>>, vector<8x128xf32>
      tpu.vector_store %arg3[%c0_12, %c0_13], %21 {strides = array<i32>} : memref<8x128xf32, #tpu.memory_space<vmem>>, vector<8x128xf32>,
      %cst_14 = arith.constant 0.000000e+00 : f32
      %23 = vector.broadcast %cst_14 : f32 to vector<8x128xf32>
      %c0_15 = arith.constant 0 : index
      %c0_16 = arith.constant 0 : index
      %24 = vector.load %arg4[%c0_15, %c0_16] : memref<8x128xf32, #tpu.memory_space<vmem>>, vector<8x128xf32>
      tpu.vector_store %arg4[%c0_15, %c0_16], %23 {strides = array<i32>} : memref<8x128xf32, #tpu.memory_space<vmem>>, vector<8x128xf32>,
    } else {
    }
    %c0 = arith.constant 0 : index
    %c0_1 = arith.constant 0 : index
    %3 = vector.load %arg3[%c0, %c0_1] : memref<8x128xf32, #tpu.memory_space<vmem>>, vector<8x128xf32>
    %c0_2 = arith.constant 0 : index
    %c0_3 = arith.constant 0 : index
    %4 = vector.load %arg4[%c0_2, %c0_3] : memref<8x128xf32, #tpu.memory_space<vmem>>, vector<8x128xf32>
    %c0_i32_4 = arith.constant 0 : i32
    %c128_i32 = arith.constant 128 : i32
    %5 = arith.muli %c0_i32_4, %c128_i32 : i32
    %6 = tpu.assume_multiple %5, 128 : i32
    %c0_5 = arith.constant 0 : index
    %7 = arith.index_cast %6 : i32 to index
    %8 = vector.load %arg2[%c0_5, %7] : memref<8x256xf32, #tpu.memory_space<vmem>>, vector<8x128xf32>
    %9 = arith.addf %3, %8 : vector<8x128xf32>
    %10 = arith.mulf %8, %8 : vector<8x128xf32>
    %11 = arith.addf %4, %10 : vector<8x128xf32>
    %c1_i32 = arith.constant 1 : i32
    %c128_i32_6 = arith.constant 128 : i32
    %12 = arith.muli %c1_i32, %c128_i32_6 : i32
    %13 = tpu.assume_multiple %12, 128 : i32
    %c0_7 = arith.constant 0 : index
    %14 = arith.index_cast %13 : i32 to index
    %15 = vector.load %arg2[%c0_7, %14] : memref<8x256xf32, #tpu.memory_space<vmem>>, vector<8x128xf32>
    %16 = arith.addf %9, %15 : vector<8x128xf32>
    %17 = arith.mulf %15, %15 : vector<8x128xf32>
    %18 = arith.addf %11, %17 : vector<8x128xf32>
    %c2_i32 = arith.constant 2 : i32
    %c0_8 = arith.constant 0 : index
    %c0_9 = arith.constant 0 : index
    %19 = vector.load %arg3[%c0_8, %c0_9] : memref<8x128xf32, #tpu.memory_space<vmem>>, vector<8x128xf32>
    tpu.vector_store %arg3[%c0_8, %c0_9], %16 {strides = array<i32>} : memref<8x128xf32, #tpu.memory_space<vmem>>, vector<8x128xf32>,
    %c0_10 = arith.constant 0 : index
    %c0_11 = arith.constant 0 : index
    %20 = vector.load %arg4[%c0_10, %c0_11] : memref<8x128xf32, #tpu.memory_space<vmem>>, vector<8x128xf32>
    tpu.vector_store %arg4[%c0_10, %c0_11], %18 {strides = array<i32>} : memref<8x128xf32, #tpu.memory_space<vmem>>, vector<8x128xf32>,
    return
  }
  func.func @transform_0(%arg0: i32, %arg1: i32) -> (i32, i32) {
    %c0_i32 = arith.constant 0 : i32
    return %arg0, %arg1 : i32, i32
  }
  func.func @transform_1(%arg0: i32, %arg1: i32) -> (i32, i32) {
    %c0_i32 = arith.constant 0 : i32
    %c0_i32_0 = arith.constant 0 : i32
    return %arg0, %c0_i32 : i32, i32
  }
  func.func @transform_2(%arg0: i32, %arg1: i32) -> (i32, i32) {
    %c0_i32 = arith.constant 0 : i32
    %c0_i32_0 = arith.constant 0 : i32
    return %arg0, %c0_i32 : i32, i32
  }
}

</mosaic_0001>

<llo_original>
// kernel: tpu_custom_call.1
$region0: #{tpu_custom_call.1}
  #allocation0 [shape = 'u32[]', space=smem, size = 0x4, offset = 0x4, fixed_abs, tag = 'smem constant byte address 0x4 - core index']
  #allocation1 [shape = 'u32[144,128]{1,0:T(1,128)}', space=vmem, size = 0x12000, scoped, tag = 'internal scratch']
  %s0 = inlined_call_operand.hbm [shape: f32[8,256], index: 0, kind: input, shape index: {}]
  %s1 = inlined_call_operand.hbm [shape: f32[8,128], index: 1, kind: output, shape index: {0}]
  %s2 = inlined_call_operand.hbm [shape: f32[8,128], index: 2, kind: output, shape index: {1}]
  %3 = xla_tuple %s1, %s2
  %s4 = sld [smem:[#allocation0]]
  $region30: #{tpu_custom_call.1} parent=0
    _
  %s6 = ssub.s32 1, %s4
  %s7 = scalar_select 0, %s6, %s4
  $region1: #{tpu_custom_call.1} parent=0
    #allocation2 [shape = 'u8[8192]{0}', space=vmem, size = 0x2000, scoped, tag = 'input window, operand 0, single buffered']
    #allocation3 [shape = 's32[1]{0}', space=sflag, size = 0x4, scoped, tag = 'scoped memory for tpu_custom_call.1']
    #allocation4 [shape = 's32[1]{0}', space=sflag, size = 0x4, scoped, tag = 'scoped memory for tpu_custom_call.1']
    #allocation5 [shape = 'u8[4096]{0}', space=vmem, size = 0x1000, scoped, tag = 'output window, operand 0, single buffered']
    #allocation6 [shape = 'u8[4096]{0}', space=vmem, size = 0x1000, scoped, tag = 'output window, operand 1, single buffered']
    #allocation7 [shape = 's32[1]{0}', space=sflag, size = 0x4, scoped, tag = 'scoped memory for tpu_custom_call.1']
    %8 = vsyncpa [#allocation3], 0
    %9 = vsyncpa [#allocation4], 0
    %10 = vsyncpa [#allocation7], 0
    // Predicated region
    $region2: #{tpu_custom_call.1} parent=1 // pred_check
      _
    $region3: #{tpu_custom_call.1} parent=1 // pred_check_branch
      %12 = sbr.rel (0) target = $region5
    $region4: #{tpu_custom_call.1} parent=1 // pred_region
      %s14 = ssub.s32 256, 256
      %15 = vsyncadd [#allocation3], %s14
      %s17 = sshll.u32 [#allocation2], 4
      %s18 = int_to_ptr.vmem [resolvable:$true] %s17
      %20 = dma.hbm_to_vmem [thread:$0]  %s0, 256, %s18, [#allocation3]
    $region5: #{tpu_custom_call.1} parent=1 // pred_fallthru
      _
    // Predicated region
    $region6: #{tpu_custom_call.1} parent=1 // pred_check
      _
    $region7: #{tpu_custom_call.1} parent=1 // pred_check_branch
      %22 = sbr.rel (0) target = $region9
    $region8: #{tpu_custom_call.1} parent=1 // pred_region
      %23 = dma.done [#allocation3], 256
    $region9: #{tpu_custom_call.1} parent=1 // pred_fallthru
      _
    %p24 = scmp.eq.s32.totalorder 0, 0
    // Predicated region
    $region10: #{tpu_custom_call.1} parent=1 // pred_check
      %p25 = pneg %p24
    $region11: #{tpu_custom_call.1} parent=1 // pred_check_branch
      %27 = sbr.rel (%p25) target = $region13
    $region12: #{tpu_custom_call.1} parent=1 // pred_region
      %28 = vst [vmem:[#allocation5] sm:$0xff] 0.0
      %29 = vst [vmem:[#allocation6] sm:$0xff] 0.0
    $region13: #{tpu_custom_call.1} parent=1 // pred_fallthru
      _
    %v30 = vld [vmem:[#allocation5] sm:$0xff]
    %v31 = vld [vmem:[#allocation6] sm:$0xff]
    %v32 = vld [vmem:[#allocation2] sm:$0xff]
    %v33 = vadd.f32 %v30, %v32
    %v34 = vmul.f32 %v32, %v32
    %v35 = vadd.f32 %v31, %v34
    %s36 = scalar_lea.vmem [#allocation2], 8
    %v37 = vld [vmem:[%s36] sm:$0xff]
    %v38 = vadd.f32 %v33, %v37
    %v39 = vmul.f32 %v37, %v37
    %v40 = vadd.f32 %v35, %v39
    %41 = vst [vmem:[#allocation5] sm:$0xff] %v38
    %42 = vst [vmem:[#allocation6] sm:$0xff] %v40
    // Predicated region
    $region14: #{tpu_custom_call.1} parent=1 // pred_check
      _
    $region15: #{tpu_custom_call.1} parent=1 // pred_check_branch
      %44 = sbr.rel (0) target = $region17
    $region16: #{tpu_custom_call.1} parent=1 // pred_region
      %s46 = ssub.s32 128, 128
      %47 = vsyncadd [#allocation4], %s46
      %s49 = sshll.u32 [#allocation5], 4
      %s50 = int_to_ptr.vmem [resolvable:$true] %s49
      %52 = dma.vmem_to_hbm [thread:$0]  %s50, 128, %s1, [#allocation4]
    $region17: #{tpu_custom_call.1} parent=1 // pred_fallthru
      _
    // Predicated region
    $region18: #{tpu_custom_call.1} parent=1 // pred_check
      _
    $region19: #{tpu_custom_call.1} parent=1 // pred_check_branch
      %54 = sbr.rel (0) target = $region21
    $region20: #{tpu_custom_call.1} parent=1 // pred_region
      %s56 = ssub.s32 128, 128
      %57 = vsyncadd [#allocation7], %s56
      %s59 = sshll.u32 [#allocation6], 4
      %s60 = int_to_ptr.vmem [resolvable:$true] %s59
      %62 = dma.vmem_to_hbm [thread:$0]  %s60, 128, %s2, [#allocation7]
    $region21: #{tpu_custom_call.1} parent=1 // pred_fallthru
      _
    // Predicated region
    $region22: #{tpu_custom_call.1} parent=1 // pred_check
      _
    $region23: #{tpu_custom_call.1} parent=1 // pred_check_branch
      %64 = sbr.rel (0) target = $region25
    $region24: #{tpu_custom_call.1} parent=1 // pred_region
      %65 = dma.done [#allocation4], 128
    $region25: #{tpu_custom_call.1} parent=1 // pred_fallthru
      _
    // Predicated region
    $region26: #{tpu_custom_call.1} parent=1 // pred_check
      _
    $region27: #{tpu_custom_call.1} parent=1 // pred_check_branch
      %67 = sbr.rel (0) target = $region29
    $region28: #{tpu_custom_call.1} parent=1 // pred_region
      %68 = dma.done [#allocation7], 128
    $region29: #{tpu_custom_call.1} parent=1 // pred_fallthru
      _
    %69 = vsyncpa [#allocation3], 1
    %70 = vsyncpa [#allocation4], 1
    %71 = vsyncpa [#allocation7], 1

</llo_original>
